<compile_context>
chip_gen: v6e
topology: v6e:2x2x1
jax: 0.10.0
libtpu: 0.0.40
codegen_flags: <defaults>
</compile_context>

<pallas_src>
import jax
import jax.numpy as jnp
from jax.experimental import pallas as pl
from jax.experimental.pallas import tpu as pltpu

BN_EPS = 1e-5
_MIB = 1024 * 1024
_MAX_NB = 8                      # max batch-fold (static in-kernel unroll)
_INTERMEDIATE_DTYPE = jnp.bfloat16


def _vmem_capacity_bytes():
    """Per-TensorCore VMEM capacity; conservative fallback (v7x = 64 MiB)."""
    try:
        info = pltpu.get_tpu_info()
        cap = int(getattr(info, "vmem_capacity_bytes", 0))
        if cap > 0:
            return cap
    except Exception:
        pass
    return 64 * _MIB


_VMEM_CAP_BYTES = _vmem_capacity_bytes()
# <= 48 MiB on v7x (64 MiB physical), up to 96 MiB on v5e/v6e (128 MiB physical).
_VMEM_LIMIT_BYTES = max(32 * _MIB, min(_VMEM_CAP_BYTES - 16 * _MIB, 96 * _MIB))
_BLOCK_BUDGET_BYTES = _VMEM_LIMIT_BYTES // 2     # double-buffered block budget
_FUSE_BUDGET_BYTES = _VMEM_LIMIT_BYTES // 3      # whole-network-in-VMEM budget


def _choose_blocking(n, hw, per_col_bytes, budget_bytes):
    """Pick (nb, t): nb | n (nb <= _MAX_NB), t a multiple-of-128 divisor of hw
    (or hw itself), maximizing the per-step slab subject to
    nb * t * per_col_bytes <= budget_bytes."""
    cands = {hw}
    d = 1
    while d * d <= hw:
        if hw % d == 0:
            if d % 128 == 0:
                cands.add(d)
            if (hw // d) % 128 == 0:
                cands.add(hw // d)
        d += 1
    cands = sorted(cands)
    t = cands[0]
    for c in cands:
        if c * per_col_bytes <= budget_bytes:
            t = c
    nb = 1
    for c in range(min(n, _MAX_NB), 0, -1):
        if n % c == 0 and c * t * per_col_bytes <= budget_bytes:
            nb = c
            break
    return nb, t


# ---------------------------------------------------------------------------
# Fused path: whole network in one pallas_call, everything resident in VMEM.
# ---------------------------------------------------------------------------
def _make_fused_kernel(num_layers):
    def kernel(*refs):
        # refs = (x_ref, [w, gamma, beta] * num_layers, out_ref); x is (C0, N*HW).
        x_ref = refs[0]
        out_ref = refs[-1]
        x = x_ref[...].astype(jnp.float32)
        m = x.shape[1]
        for i in range(num_layers):
            w = refs[1 + 3 * i][...]          # (cout, cin)
            gamma = refs[2 + 3 * i][...]      # (cout, 1)
            beta = refs[3 + 3 * i][...]       # (cout, 1)
            z = jnp.dot(w, x, preferred_element_type=jnp.float32)     # (cout, m)
            mean = jnp.sum(z, axis=1, keepdims=True) / m
            d = z - mean
            var = jnp.sum(d * d, axis=1, keepdims=True) / m           # centered
            inv = jax.lax.rsqrt(var + BN_EPS)
            x = jnp.maximum(d * (gamma * inv) + beta, 0.0)
        out_ref[...] = x.astype(out_ref.dtype)
    return kernel


def _fused_forward(x3, params):
    n, c0, hw = x3.shape
    m = n * hw
    c_last = params[-1][0].shape[0]
    # (N, C0, HW) -> (C0, N*HW); tiny (gated by _FUSE_BUDGET_BYTES), done in XLA.
    x2 = jnp.transpose(x3, (1, 0, 2)).reshape(c0, m)
    flat = []
    for (w, g, b) in params:
        flat.extend((w, g, b))
    out2 = pl.pallas_call(
        _make_fused_kernel(len(params)),
        out_shape=jax.ShapeDtypeStruct((c_last, m), jnp.float32),
        compiler_params=pltpu.CompilerParams(vmem_limit_bytes=_VMEM_LIMIT_BYTES),
    )(x2, *flat)
    return jnp.transpose(out2.reshape(c_last, n, hw), (1, 0, 2))


def _fusion_fits(n, hw, channels):
    m = n * hw
    peak_pair = max(channels[i] + channels[i + 1] for i in range(len(channels) - 1))
    est = 4 * m * (channels[0] + channels[-1] + peak_pair)
    return est <= _FUSE_BUDGET_BYTES


# ---------------------------------------------------------------------------
# Tiled path kernels
# ---------------------------------------------------------------------------
def _stats_kernel(x_ref, w_ref, sum_ref, sumsq_ref):
    """Pass A for the first layer: per-batch-block partial sum / sumsq of w @ x."""
    @pl.when(pl.program_id(1) == 0)
    def _():
        sum_ref[...] = jnp.zeros_like(sum_ref)
        sumsq_ref[...] = jnp.zeros_like(sumsq_ref)

    nb = x_ref.shape[0]
    cout = w_ref.shape[0]
    w = w_ref[...]
    s = jnp.zeros((cout, 1), jnp.float32)
    ss = jnp.zeros((cout, 1), jnp.float32)
    for b in range(nb):                       # static unroll, nb <= _MAX_NB
        y = jnp.dot(w, x_ref[b].astype(jnp.float32),
                    preferred_element_type=jnp.float32)
        s = s + jnp.sum(y, axis=1, keepdims=True)
        ss = ss + jnp.sum(y * y, axis=1, keepdims=True)
    sum_ref[...] += s[None]
    sumsq_ref[...] += ss[None]


def _norm_relu_next_stats_kernel(x_ref, wf_ref, shift_ref, wn_ref,
                                 y_ref, sum_ref, sumsq_ref):
    """Pass B of layer i (BN folded into weight + shift, ReLU) fused with pass A
    of layer i+1 (partial stats of w_next @ y)."""
    @pl.when(pl.program_id(1) == 0)
    def _():
        sum_ref[...] = jnp.zeros_like(sum_ref)
        sumsq_ref[...] = jnp.zeros_like(sumsq_ref)

    nb = x_ref.shape[0]
    cnext = wn_ref.shape[0]
    wf = wf_ref[...]
    shift = shift_ref[...]                    # (cout, 1)
    wn = wn_ref[...]
    s = jnp.zeros((cnext, 1), jnp.float32)
    ss = jnp.zeros((cnext, 1), jnp.float32)
    for b in range(nb):
        z = jnp.dot(wf, x_ref[b].astype(jnp.float32),
                    preferred_element_type=jnp.float32)     # (cout, t)
        y = jnp.maximum(z + shift, 0.0)
        y_ref[b] = y.astype(y_ref.dtype)                     # bf16 intermediate
        z_next = jnp.dot(wn, y, preferred_element_type=jnp.float32)  # (cnext, t)
        s = s + jnp.sum(z_next, axis=1, keepdims=True)
        ss = ss + jnp.sum(z_next * z_next, axis=1, keepdims=True)
    sum_ref[...] += s[None]
    sumsq_ref[...] += ss[None]


def _norm_relu_kernel(x_ref, wf_ref, shift_ref, y_ref):
    """Pass B of the last layer (no next-layer stats)."""
    nb = x_ref.shape[0]
    wf = wf_ref[...]
    shift = shift_ref[...]
    for b in range(nb):
        z = jnp.dot(wf, x_ref[b].astype(jnp.float32),
                    preferred_element_type=jnp.float32)
        y_ref[b] = jnp.maximum(z + shift, 0.0).astype(y_ref.dtype)


# ---------------------------------------------------------------------------
# Tiled path pallas_call wrappers
# ---------------------------------------------------------------------------
def _stats_pass(x3, w):
    n, cin, hw = x3.shape
    cout = w.shape[0]
    per_col = 2 * cin * x3.dtype.itemsize               # double-buffered x stream
    nb, t = _choose_blocking(n, hw, per_col, _BLOCK_BUDGET_BYTES)
    grid = (n // nb, hw // t)
    return pl.pallas_call(
        _stats_kernel,
        out_shape=(jax.ShapeDtypeStruct((grid[0], cout, 1), jnp.float32),
                   jax.ShapeDtypeStruct((grid[0], cout, 1), jnp.float32)),
        grid_spec=pltpu.PrefetchScalarGridSpec(
            num_scalar_prefetch=0,
            grid=grid,
            in_specs=[
                pl.BlockSpec((nb, cin, t), lambda i, j: (i, 0, j)),
                pl.BlockSpec((cout, cin), lambda i, j: (0, 0)),
            ],
            out_specs=(
                pl.BlockSpec((1, cout, 1), lambda i, j: (i, 0, 0)),
                pl.BlockSpec((1, cout, 1), lambda i, j: (i, 0, 0)),
            ),
        ),
        compiler_params=pltpu.CompilerParams(
            # batch axis parallel (per-batch partial accumulators), HW reduction serial.
            dimension_semantics=("parallel", "arbitrary"),
            vmem_limit_bytes=_VMEM_LIMIT_BYTES),
    )(x3, w)


def _norm_relu_next_stats_pass(x3, w_folded, shift, w_next):
    n, cin, hw = x3.shape
    cout = w_folded.shape[0]
    cnext = w_next.shape[0]
    y_dtype = _INTERMEDIATE_DTYPE
    per_col = 2 * (cin * x3.dtype.itemsize + cout * jnp.dtype(y_dtype).itemsize)
    nb, t = _choose_blocking(n, hw, per_col, _BLOCK_BUDGET_BYTES)
    grid = (n // nb, hw // t)
    return pl.pallas_call(
        _norm_relu_next_stats_kernel,
        out_shape=(jax.ShapeDtypeStruct((n, cout, hw), y_dtype),
                   jax.ShapeDtypeStruct((grid[0], cnext, 1), jnp.float32),
                   jax.ShapeDtypeStruct((grid[0], cnext, 1), jnp.float32)),
        grid_spec=pltpu.PrefetchScalarGridSpec(
            num_scalar_prefetch=0,
            grid=grid,
            in_specs=[
                pl.BlockSpec((nb, cin, t), lambda i, j: (i, 0, j)),
                pl.BlockSpec((cout, cin), lambda i, j: (0, 0)),
                pl.BlockSpec((cout, 1), lambda i, j: (0, 0)),
                pl.BlockSpec((cnext, cout), lambda i, j: (0, 0)),
            ],
            out_specs=(
                pl.BlockSpec((nb, cout, t), lambda i, j: (i, 0, j)),
                pl.BlockSpec((1, cnext, 1), lambda i, j: (i, 0, 0)),
                pl.BlockSpec((1, cnext, 1), lambda i, j: (i, 0, 0)),
            ),
        ),
        compiler_params=pltpu.CompilerParams(
            dimension_semantics=("parallel", "arbitrary"),
            vmem_limit_bytes=_VMEM_LIMIT_BYTES),
    )(x3, w_folded, shift, w_next)


def _norm_relu_pass(x3, w_folded, shift, out_dtype=jnp.float32):
    n, cin, hw = x3.shape
    cout = w_folded.shape[0]
    per_col = 2 * (cin * x3.dtype.itemsize + cout * jnp.dtype(out_dtype).itemsize)
    nb, t = _choose_blocking(n, hw, per_col, _BLOCK_BUDGET_BYTES)
    grid = (n // nb, hw // t)
    return pl.pallas_call(
        _norm_relu_kernel,
        out_shape=jax.ShapeDtypeStruct((n, cout, hw), out_dtype),
        grid_spec=pltpu.PrefetchScalarGridSpec(
            num_scalar_prefetch=0,
            grid=grid,
            in_specs=[
                pl.BlockSpec((nb, cin, t), lambda i, j: (i, 0, j)),
                pl.BlockSpec((cout, cin), lambda i, j: (0, 0)),
                pl.BlockSpec((cout, 1), lambda i, j: (0, 0)),
            ],
            out_specs=pl.BlockSpec((nb, cout, t), lambda i, j: (i, 0, j)),
        ),
        compiler_params=pltpu.CompilerParams(
            # fully independent tiles -> parallel (megacore sharding on v7x).
            dimension_semantics=("parallel", "parallel"),
            vmem_limit_bytes=_VMEM_LIMIT_BYTES),
    )(x3, w_folded, shift)


# ---------------------------------------------------------------------------
# Module-level wrapper
# ---------------------------------------------------------------------------
def _fold_bn(part_sum, part_sumsq, gamma, beta, w, m_total):
    """Combine per-batch-block partials, fold BN into (folded weight, shift)."""
    s = jnp.sum(part_sum, axis=0)            # (c, 1)
    ss = jnp.sum(part_sumsq, axis=0)         # (c, 1)
    mean = s / m_total
    var = jnp.maximum(ss / m_total - mean * mean, 0.0)
    inv = jax.lax.rsqrt(var + BN_EPS)
    scale = gamma * inv                      # (c, 1)
    shift = beta - mean * scale              # (c, 1)
    w_folded = scale * w                     # BN scale folded into conv weight
    return w_folded, shift


def _tiled_forward(x3, params):
    n, _, hw = x3.shape
    m_total = float(n * hw)
    num_layers = len(params)
    psum, psumsq = _stats_pass(x3, params[0][0])       # pass A for layer 0
    for i in range(num_layers):
        w_i, gamma_i, beta_i = params[i]
        w_folded, shift = _fold_bn(psum, psumsq, gamma_i, beta_i, w_i, m_total)
        if i + 1 < num_layers:
            w_next = params[i + 1][0]
            x3, psum, psumsq = _norm_relu_next_stats_pass(x3, w_folded, shift, w_next)
        else:
            x3 = _norm_relu_pass(x3, w_folded, shift)
    return x3


def init_mlp_params(planes_tab, key):
    """Match the PyTorch module's __init__ (deterministic given `key`).

    Conv2d: kaiming_normal_(mode='fan_out', nonlinearity='relu')
            -> std = sqrt(2 / fan_out), fan_out = Cout*1*1.
    BN: weight = 1, bias = 0.
    """
    params = []
    for i in range(len(planes_tab) - 1):
        cin, cout = planes_tab[i], planes_tab[i + 1]
        key, sub = jax.random.split(key)
        std = (2.0 / float(cout)) ** 0.5
        w = std * jax.random.normal(sub, (cout, cin), dtype=jnp.float32)
        gamma = jnp.ones((cout, 1), dtype=jnp.float32)
        beta = jnp.zeros((cout, 1), dtype=jnp.float32)
        params.append((w, gamma, beta))
    return params


def mlp_forward(x_nchw, params, fuse=None):
    """Forward pass: x (N, C0, H, W) -> (N, Ck, H, W), float32."""
    if not params:
        return x_nchw
    n, c0, h, w = x_nchw.shape
    hw = h * w
    x3 = x_nchw.reshape(n, c0, hw)            # free reshape (no transpose)
    channels = [c0] + [p[0].shape[0] for p in params]
    if fuse is None:
        fuse = _fusion_fits(n, hw, channels)
    if fuse:
        y3 = _fused_forward(x3, params)
    else:
        y3 = _tiled_forward(x3, params)
    return y3.reshape(n, channels[-1], h, w)  # free reshape


# ---------------------------------------------------------------------------
# Pure-JAX reference (for a correctness sanity check)
# ---------------------------------------------------------------------------
def _mlp_reference(x_nchw, params):
    n, c, h, w = x_nchw.shape
    x2 = x_nchw.reshape(n, c, h * w)
    for (wt, gamma, beta) in params:
        y = jnp.einsum('oc,ncm->nom', wt, x2,
                       precision=jax.lax.Precision.HIGHEST)
        mean = jnp.mean(y, axis=(0, 2), keepdims=True)
        var = jnp.mean((y - mean) ** 2, axis=(0, 2), keepdims=True)
        y = (y - mean) * jax.lax.rsqrt(var + BN_EPS)
        y = y * gamma[None, :, :] + beta[None, :, :]
        x2 = jnp.maximum(y, 0.0)
    return x2.reshape(n, -1, h, w)


if __name__ == "__main__":
    key = jax.random.PRNGKey(0)
    planes_tab = [4, 32, 16]

    k_x, k_p = jax.random.split(key)
    x = jax.random.normal(k_x, (2, planes_tab[0], 16, 16), dtype=jnp.float32)
    params = init_mlp_params(planes_tab, k_p)

    ref = _mlp_reference(x, params)

    # Fused (auto-selected for this small shape): single pallas_call, VMEM resident.
    out_fused = jax.jit(mlp_forward)(x, params)
    jax.block_until_ready(out_fused)
    assert out_fused.shape == (2, planes_tab[-1], 16, 16), out_fused.shape
    assert out_fused.dtype == jnp.float32
    err_fused = float(jnp.max(jnp.abs(out_fused - ref)))
    assert err_fused < 5e-2, f"fused path max abs error vs reference: {err_fused}"

    # Tiled path (forced) - exercises the big-input code path (bf16 intermediates,
    # per-batch partial stats, batch-folded lane-dense blocks).
    out_tiled = jax.jit(lambda a, p: mlp_forward(a, p, fuse=False))(x, params)
    jax.block_until_ready(out_tiled)
    assert out_tiled.shape == (2, planes_tab[-1], 16, 16), out_tiled.shape
    assert out_tiled.dtype == jnp.float32
    err_tiled = float(jnp.max(jnp.abs(out_tiled - ref)))
    assert err_tiled < 1e-1, f"tiled path max abs error vs reference: {err_tiled}"

    print("KERNEL_OK")
</pallas_src>

<mosaic_0001>
module attributes {stable_mosaic.version = 11 : i64} {
  func.func @kernel(%arg0: memref<4x512xf32, #tpu.memory_space<vmem>>, %arg1: memref<32x4xf32, #tpu.memory_space<vmem>>, %arg2: memref<32x1xf32, #tpu.memory_space<vmem>>, %arg3: memref<32x1xf32, #tpu.memory_space<vmem>>, %arg4: memref<16x32xf32, #tpu.memory_space<vmem>>, %arg5: memref<16x1xf32, #tpu.memory_space<vmem>>, %arg6: memref<16x1xf32, #tpu.memory_space<vmem>>, %arg7: memref<16x512xf32, #tpu.memory_space<vmem>>) attributes {dimension_semantics = [], scalar_prefetch = 0 : i64, scratch_operands = 0 : i64, tpu.core_type = #tpu.core_type<tc>} {
    %c0 = arith.constant 0 : index
    %c0_0 = arith.constant 0 : index
    %0 = vector.load %arg0[%c0, %c0_0] : memref<4x512xf32, #tpu.memory_space<vmem>>, vector<4x512xf32>
    %c0_1 = arith.constant 0 : index
    %c0_2 = arith.constant 0 : index
    %1 = vector.load %arg1[%c0_1, %c0_2] : memref<32x4xf32, #tpu.memory_space<vmem>>, vector<32x4xf32>
    %c0_3 = arith.constant 0 : index
    %c0_4 = arith.constant 0 : index
    %2 = vector.load %arg2[%c0_3, %c0_4] : memref<32x1xf32, #tpu.memory_space<vmem>>, vector<32x1xf32>
    %c0_5 = arith.constant 0 : index
    %c0_6 = arith.constant 0 : index
    %3 = vector.load %arg3[%c0_5, %c0_6] : memref<32x1xf32, #tpu.memory_space<vmem>>, vector<32x1xf32>
    %cst = arith.constant dense<0.000000e+00> : vector<32x512xf32>
    %4 = tpu.matmul %1, %0, %cst {dimension_numbers = #tpu.dot_dimension_numbers<[1], [0], [0], [1], [0, 0, 1, 1], [], []>} : vector<32x4xf32>, vector<4x512xf32>, vector<32x512xf32> -> vector<32x512xf32>
    %cst_7 = arith.constant dense<0.000000e+00> : vector<32xf32>
    %5 = vector.multi_reduction <add>, %4, %cst_7 [1] : vector<32x512xf32> to vector<32xf32>
    %6 = vector.shape_cast %5 : vector<32xf32> to vector<32x1xf32>
    %cst_8 = arith.constant 5.120000e+02 : f32
    %7 = vector.broadcast %cst_8 : f32 to vector<32x1xf32>
    %8 = arith.divf %6, %7 : vector<32x1xf32>
    %9 = vector.broadcast %8 : vector<32x1xf32> to vector<32x512xf32>
    %10 = arith.subf %4, %9 : vector<32x512xf32>
    %11 = arith.mulf %10, %10 : vector<32x512xf32>
    %cst_9 = arith.constant dense<0.000000e+00> : vector<32xf32>
    %12 = vector.multi_reduction <add>, %11, %cst_9 [1] : vector<32x512xf32> to vector<32xf32>
    %13 = vector.shape_cast %12 : vector<32xf32> to vector<32x1xf32>
    %cst_10 = arith.constant 5.120000e+02 : f32
    %14 = vector.broadcast %cst_10 : f32 to vector<32x1xf32>
    %15 = arith.divf %13, %14 : vector<32x1xf32>
    %cst_11 = arith.constant 9.99999974E-6 : f32
    %16 = vector.broadcast %cst_11 : f32 to vector<32x1xf32>
    %17 = arith.addf %15, %16 : vector<32x1xf32>
    %18 = math.rsqrt %17 : vector<32x1xf32>
    %19 = arith.mulf %2, %18 : vector<32x1xf32>
    %20 = vector.broadcast %19 : vector<32x1xf32> to vector<32x512xf32>
    %21 = arith.mulf %10, %20 : vector<32x512xf32>
    %22 = vector.broadcast %3 : vector<32x1xf32> to vector<32x512xf32>
    %23 = arith.addf %21, %22 : vector<32x512xf32>
    %cst_12 = arith.constant 0.000000e+00 : f32
    %24 = vector.broadcast %cst_12 : f32 to vector<32x512xf32>
    %25 = arith.maximumf %23, %24 : vector<32x512xf32>
    %c0_13 = arith.constant 0 : index
    %c0_14 = arith.constant 0 : index
    %26 = vector.load %arg4[%c0_13, %c0_14] : memref<16x32xf32, #tpu.memory_space<vmem>>, vector<16x32xf32>
    %c0_15 = arith.constant 0 : index
    %c0_16 = arith.constant 0 : index
    %27 = vector.load %arg5[%c0_15, %c0_16] : memref<16x1xf32, #tpu.memory_space<vmem>>, vector<16x1xf32>
    %c0_17 = arith.constant 0 : index
    %c0_18 = arith.constant 0 : index
    %28 = vector.load %arg6[%c0_17, %c0_18] : memref<16x1xf32, #tpu.memory_space<vmem>>, vector<16x1xf32>
    %cst_19 = arith.constant dense<0.000000e+00> : vector<16x512xf32>
    %29 = tpu.matmul %26, %25, %cst_19 {dimension_numbers = #tpu.dot_dimension_numbers<[1], [0], [0], [1], [0, 0, 1, 1], [], []>} : vector<16x32xf32>, vector<32x512xf32>, vector<16x512xf32> -> vector<16x512xf32>
    %cst_20 = arith.constant dense<0.000000e+00> : vector<16xf32>
    %30 = vector.multi_reduction <add>, %29, %cst_20 [1] : vector<16x512xf32> to vector<16xf32>
    %31 = vector.shape_cast %30 : vector<16xf32> to vector<16x1xf32>
    %cst_21 = arith.constant 5.120000e+02 : f32
    %32 = vector.broadcast %cst_21 : f32 to vector<16x1xf32>
    %33 = arith.divf %31, %32 : vector<16x1xf32>
    %34 = vector.broadcast %33 : vector<16x1xf32> to vector<16x512xf32>
    %35 = arith.subf %29, %34 : vector<16x512xf32>
    %36 = arith.mulf %35, %35 : vector<16x512xf32>
    %cst_22 = arith.constant dense<0.000000e+00> : vector<16xf32>
    %37 = vector.multi_reduction <add>, %36, %cst_22 [1] : vector<16x512xf32> to vector<16xf32>
    %38 = vector.shape_cast %37 : vector<16xf32> to vector<16x1xf32>
    %cst_23 = arith.constant 5.120000e+02 : f32
    %39 = vector.broadcast %cst_23 : f32 to vector<16x1xf32>
    %40 = arith.divf %38, %39 : vector<16x1xf32>
    %cst_24 = arith.constant 9.99999974E-6 : f32
    %41 = vector.broadcast %cst_24 : f32 to vector<16x1xf32>
    %42 = arith.addf %40, %41 : vector<16x1xf32>
    %43 = math.rsqrt %42 : vector<16x1xf32>
    %44 = arith.mulf %27, %43 : vector<16x1xf32>
    %45 = vector.broadcast %44 : vector<16x1xf32> to vector<16x512xf32>
    %46 = arith.mulf %35, %45 : vector<16x512xf32>
    %47 = vector.broadcast %28 : vector<16x1xf32> to vector<16x512xf32>
    %48 = arith.addf %46, %47 : vector<16x512xf32>
    %cst_25 = arith.constant 0.000000e+00 : f32
    %49 = vector.broadcast %cst_25 : f32 to vector<16x512xf32>
    %50 = arith.maximumf %48, %49 : vector<16x512xf32>
    %c0_26 = arith.constant 0 : index
    %c0_27 = arith.constant 0 : index
    %51 = vector.load %arg7[%c0_26, %c0_27] : memref<16x512xf32, #tpu.memory_space<vmem>>, vector<16x512xf32>
    tpu.vector_store %arg7[%c0_26, %c0_27], %50 {strides = array<i32>} : memref<16x512xf32, #tpu.memory_space<vmem>>, vector<16x512xf32>,
    return
  }
}

</mosaic_0001>

<llo_original>
// kernel: mlp_forward.1
$region0: #{mlp_forward.1}
  #allocation0 [shape = 'u32[]', space=smem, size = 0x4, offset = 0x4, fixed_abs, tag = 'smem constant byte address 0x4 - core index']
  #allocation1 [shape = 'u32[144,128]{1,0:T(1,128)}', space=vmem, size = 0x12000, scoped, tag = 'internal scratch']
  %s0 = inlined_call_operand.vmem [shape: f32[4,512], index: 0, kind: input, shape index: {}]
  %s1 = inlined_call_operand.vmem [shape: f32[32,4], index: 1, kind: input, shape index: {}]
  %s2 = inlined_call_operand.vmem [shape: f32[32,1], index: 2, kind: input, shape index: {}]
  %s3 = inlined_call_operand.vmem [shape: f32[32,1], index: 3, kind: input, shape index: {}]
  %s4 = inlined_call_operand.vmem [shape: f32[16,32], index: 4, kind: input, shape index: {}]
  %s5 = inlined_call_operand.vmem [shape: f32[16,1], index: 5, kind: input, shape index: {}]
  %s6 = inlined_call_operand.vmem [shape: f32[16,1], index: 6, kind: input, shape index: {}]
  %s7 = inlined_call_operand.vmem [shape: f32[16,512], index: 7, kind: output, shape index: {}]
  %s8 = sld [smem:[#allocation0]]
  $region38: #{mlp_forward.1} parent=0
    _
  %s10 = ssub.s32 1, %s8
  %s11 = scalar_select 0, %s10, %s8
  // Predicated region
  $region2: #{mlp_forward.1} parent=0 // pred_check
    _
  $region3: #{mlp_forward.1} parent=0 // pred_check_branch
    %13 = sbr.rel (0) target = $region5
  $region4: #{mlp_forward.1} parent=0 // pred_region
    _
  $region5: #{mlp_forward.1} parent=0 // pred_fallthru
    _
  // Predicated region
  $region6: #{mlp_forward.1} parent=0 // pred_check
    _
  $region7: #{mlp_forward.1} parent=0 // pred_check_branch
    %15 = sbr.rel (0) target = $region9
  $region8: #{mlp_forward.1} parent=0 // pred_region
    _
  $region9: #{mlp_forward.1} parent=0 // pred_fallthru
    _
  // Predicated region
  $region10: #{mlp_forward.1} parent=0 // pred_check
    _
  $region11: #{mlp_forward.1} parent=0 // pred_check_branch
    %17 = sbr.rel (0) target = $region13
  $region12: #{mlp_forward.1} parent=0 // pred_region
    _
  $region13: #{mlp_forward.1} parent=0 // pred_fallthru
    _
  // Predicated region
  $region14: #{mlp_forward.1} parent=0 // pred_check
    _
  $region15: #{mlp_forward.1} parent=0 // pred_check_branch
    %19 = sbr.rel (0) target = $region17
  $region16: #{mlp_forward.1} parent=0 // pred_region
    _
  $region17: #{mlp_forward.1} parent=0 // pred_fallthru
    _
  // Predicated region
  $region18: #{mlp_forward.1} parent=0 // pred_check
    _
  $region19: #{mlp_forward.1} parent=0 // pred_check_branch
    %21 = sbr.rel (0) target = $region21
  $region20: #{mlp_forward.1} parent=0 // pred_region
    _
  $region21: #{mlp_forward.1} parent=0 // pred_fallthru
    _
  // Predicated region
  $region22: #{mlp_forward.1} parent=0 // pred_check
    _
  $region23: #{mlp_forward.1} parent=0 // pred_check_branch
    %23 = sbr.rel (0) target = $region25
  $region24: #{mlp_forward.1} parent=0 // pred_region
    _
  $region25: #{mlp_forward.1} parent=0 // pred_fallthru
    _
  // Predicated region
  $region26: #{mlp_forward.1} parent=0 // pred_check
    _
  $region27: #{mlp_forward.1} parent=0 // pred_check_branch
    %25 = sbr.rel (0) target = $region29
  $region28: #{mlp_forward.1} parent=0 // pred_region
    _
  $region29: #{mlp_forward.1} parent=0 // pred_fallthru
    _
  %v26 = vld [vmem:[%s0] sm:$0xff]
  %v27 = vld [vmem:[%s0 + $0x8] sm:$0xff]
  %v28 = vld [vmem:[%s1] sm:$0xff]
  %v29 = vld [vmem:[%s1 + $0x8] sm:$0xff]
  %v30 = vld [vmem:[%s1 + $0x10] sm:$0xff]
  %v31 = vld [vmem:[%s1 + $0x18] sm:$0xff]
  %v32 = vld [vmem:[%s2] sm:$0xff]
  %v33 = vld [vmem:[%s2 + $0x8] sm:$0xff]
  %v34 = vld [vmem:[%s2 + $0x10] sm:$0xff]
  %v35 = vld [vmem:[%s2 + $0x18] sm:$0xff]
  %v36 = vld [vmem:[%s3] sm:$0xff]
  %v37 = vld [vmem:[%s3 + $0x8] sm:$0xff]
  %v38 = vld [vmem:[%s3 + $0x10] sm:$0xff]
  %v39 = vld [vmem:[%s3 + $0x18] sm:$0xff]
  %v42 = vcombine.high %v26, %v26
  %v43 = vcombine.high %v27, %v27
  %vm44 = vcmask 31744
  %v46 = vsel %vm44, %v28, 0
  %v49 = vsel %vm44, %v29, 0
  %v52 = vsel %vm44, %v30, 0
  %v55 = vsel %vm44, %v31, 0
  %vm57 = vcmask 1043456
  %v58 = vsel %vm57, %v26, 0
  %v60 = vsel %vm57, %v42, 0
  %v62 = vsel %vm57, %v27, 0
  %v64 = vsel %vm57, %v43, 0
  %66 = vmatprep.subr.mxu0 0.0
  %67 = vmatpush1.msra.mxu0 0.0
  %68 = vmatprep.subr.mxu0 0.0
  %69 = vmatpush1.msra.mxu0 0.0
  %70 = vmatprep.subr.mxu0 0.0
  %71 = vmatpush1.msra.mxu0 0.0
  %72 = vmatprep.subr.mxu0 0.0
  %73 = vmatpush1.msra.mxu0 0.0
  %74 = vmatprep.subr.mxu0 0.0
  %75 = vmatpush1.msra.mxu0 0.0
  %76 = vmatprep.subr.mxu0 0.0
  %77 = vmatpush1.msra.mxu0 0.0
  %78 = vmatprep.subr.mxu0 0.0
  %79 = vmatpush1.msra.mxu0 0.0
  %80 = vmatprep.subr.mxu0 0.0
  %81 = vmatpush1.msra.mxu0 0.0
  %82 = vmatprep.subr.mxu0 0.0
  %83 = vmatpush1.msra.mxu0 0.0
  %84 = vmatprep.subr.mxu0 0.0
  %85 = vmatpush1.msra.mxu0 0.0
  %86 = vmatprep.subr.mxu0 0.0
  %87 = vmatpush1.msra.mxu0 0.0
  %88 = vmatprep.subr.mxu0 0.0
  %89 = vmatpush1.msra.mxu0 0.0
  %90 = vmatprep.subr.mxu0 0.0
  %91 = vmatpush1.msra.mxu0 0.0
  %92 = vmatprep.subr.mxu0 0.0
  %93 = vmatpush1.msra.mxu0 0.0
  %94 = vmatprep.subr.mxu0 0.0
  %95 = vmatpush1.msra.mxu0 0.0
  %96 = vmatprep.subr.mxu0 %v60
  %97 = vmatpush1.msra.mxu0 %v58
  %98 = vmatprep.subr.mxu0 0.0
  %99 = vmatpush2.msra.mxu0 0.0
  %100 = vmatprep.subr.mxu0 0.0
  %101 = vmatpush2.msra.mxu0 0.0
  %102 = vmatprep.subr.mxu0 0.0
  %103 = vmatpush2.msra.mxu0 0.0
  %104 = vmatprep.subr.mxu0 0.0
  %105 = vmatpush2.msra.mxu0 0.0
  %106 = vmatprep.subr.mxu0 0.0
  %107 = vmatpush2.msra.mxu0 0.0
  %108 = vmatprep.subr.mxu0 0.0
  %109 = vmatpush2.msra.mxu0 0.0
  %110 = vmatprep.subr.mxu0 0.0
  %111 = vmatpush2.msra.mxu0 0.0
  %112 = vmatprep.subr.mxu0 0.0
  %113 = vmatpush2.msra.mxu0 0.0
  %114 = vmatprep.subr.mxu0 0.0
  %115 = vmatpush2.msra.mxu0 0.0
  %116 = vmatprep.subr.mxu0 0.0
  %117 = vmatpush2.msra.mxu0 0.0
  %118 = vmatprep.subr.mxu0 0.0
  %119 = vmatpush2.msra.mxu0 0.0
  %120 = vmatprep.subr.mxu0 0.0
  %121 = vmatpush2.msra.mxu0 0.0
  %122 = vmatprep.subr.mxu0 0.0
  %123 = vmatpush2.msra.mxu0 0.0
  %124 = vmatprep.subr.mxu0 0.0
  %125 = vmatpush2.msra.mxu0 0.0
  %126 = vmatprep.subr.mxu0 0.0
  %127 = vmatpush2.msra.mxu0 0.0
  %128 = vmatprep.subr.mxu0 0.0
  %129 = vmatpush2.msra.mxu0 0.0
  %130 = vmatprep.mubr.f32.mxu0 0.0
  %131 = vmatmul.mubr.f32.gmra.mxu0 %v46
  %v132 = vpop.f32.mrf.mxu0
  %v133 = vadd.f32 0.0, %v132
  %v134 = vpop.f32.mrf.mxu0
  %v135 = vadd.f32 0.0, %v134
  %136 = vmatprep.mubr.f32.mxu0 0.0
  %137 = vmatmul.mubr.f32.gmra.mxu0 %v49
  %v138 = vpop.f32.mrf.mxu0
  %v139 = vadd.f32 0.0, %v138
  %v140 = vpop.f32.mrf.mxu0
  %v141 = vadd.f32 0.0, %v140
  %142 = vmatprep.mubr.f32.mxu0 0.0
  %143 = vmatmul.mubr.f32.gmra.mxu0 %v52
  %v144 = vpop.f32.mrf.mxu0
  %v145 = vadd.f32 0.0, %v144
  %v146 = vpop.f32.mrf.mxu0
  %v147 = vadd.f32 0.0, %v146
  %148 = vmatprep.mubr.f32.mxu0 0.0
  %149 = vmatmul.mubr.f32.gmra.mxu0 %v55
  %v150 = vpop.f32.mrf.mxu0
  %v151 = vadd.f32 0.0, %v150
  %v152 = vpop.f32.mrf.mxu0
  %v153 = vadd.f32 0.0, %v152
  %154 = vdwg.mxu0
  %155 = vmatprep.subr.mxu0 0.0
  %156 = vmatpush1.msra.mxu0 0.0
  %157 = vmatprep.subr.mxu0 0.0
  %158 = vmatpush1.msra.mxu0 0.0
  %159 = vmatprep.subr.mxu0 0.0
  %160 = vmatpush1.msra.mxu0 0.0
  %161 = vmatprep.subr.mxu0 0.0
  %162 = vmatpush1.msra.mxu0 0.0
  %163 = vmatprep.subr.mxu0 0.0
  %164 = vmatpush1.msra.mxu0 0.0
  %165 = vmatprep.subr.mxu0 0.0
  %166 = vmatpush1.msra.mxu0 0.0
  %167 = vmatprep.subr.mxu0 0.0
  %168 = vmatpush1.msra.mxu0 0.0
  %169 = vmatprep.subr.mxu0 0.0
  %170 = vmatpush1.msra.mxu0 0.0
  %171 = vmatprep.subr.mxu0 0.0
  %172 = vmatpush1.msra.mxu0 0.0
  %173 = vmatprep.subr.mxu0 0.0
  %174 = vmatpush1.msra.mxu0 0.0
  %175 = vmatprep.subr.mxu0 0.0
  %176 = vmatpush1.msra.mxu0 0.0
  %177 = vmatprep.subr.mxu0 0.0
  %178 = vmatpush1.msra.mxu0 0.0
  %179 = vmatprep.subr.mxu0 0.0
  %180 = vmatpush1.msra.mxu0 0.0
  %181 = vmatprep.subr.mxu0 0.0
  %182 = vmatpush1.msra.mxu0 0.0
  %183 = vmatprep.subr.mxu0 0.0
  %184 = vmatpush1.msra.mxu0 0.0
  %185 = vmatprep.subr.mxu0 %v64
  %186 = vmatpush1.msra.mxu0 %v62
  %187 = vmatprep.subr.mxu0 0.0
  %188 = vmatpush2.msra.mxu0 0.0
  %189 = vmatprep.subr.mxu0 0.0
  %190 = vmatpush2.msra.mxu0 0.0
  %191 = vmatprep.subr.mxu0 0.0
  %192 = vmatpush2.msra.mxu0 0.0
  %193 = vmatprep.subr.mxu0 0.0
  %194 = vmatpush2.msra.mxu0 0.0
  %195 = vmatprep.subr.mxu0 0.0
  %196 = vmatpush2.msra.mxu0 0.0
  %197 = vmatprep.subr.mxu0 0.0
  %198 = vmatpush2.msra.mxu0 0.0
  %199 = vmatprep.subr.mxu0 0.0
  %200 = vmatpush2.msra.mxu0 0.0
  %201 = vmatprep.subr.mxu0 0.0
  %202 = vmatpush2.msra.mxu0 0.0
  %203 = vmatprep.subr.mxu0 0.0
  %204 = vmatpush2.msra.mxu0 0.0
  %205 = vmatprep.subr.mxu0 0.0
  %206 = vmatpush2.msra.mxu0 0.0
  %207 = vmatprep.subr.mxu0 0.0
  %208 = vmatpush2.msra.mxu0 0.0
  %209 = vmatprep.subr.mxu0 0.0
  %210 = vmatpush2.msra.mxu0 0.0
  %211 = vmatprep.subr.mxu0 0.0
  %212 = vmatpush2.msra.mxu0 0.0
  %213 = vmatprep.subr.mxu0 0.0
  %214 = vmatpush2.msra.mxu0 0.0
  %215 = vmatprep.subr.mxu0 0.0
  %216 = vmatpush2.msra.mxu0 0.0
  %217 = vmatprep.subr.mxu0 0.0
  %218 = vmatpush2.msra.mxu0 0.0
  %219 = vmatprep.mubr.f32.mxu0 0.0
  %220 = vmatmul.mubr.f32.gmra.mxu0 %v46
  %v221 = vpop.f32.mrf.mxu0
  %v222 = vadd.f32 0.0, %v221
  %v223 = vpop.f32.mrf.mxu0
  %v224 = vadd.f32 0.0, %v223
  %225 = vmatprep.mubr.f32.mxu0 0.0
  %226 = vmatmul.mubr.f32.gmra.mxu0 %v49
  %v227 = vpop.f32.mrf.mxu0
  %v228 = vadd.f32 0.0, %v227
  %v229 = vpop.f32.mrf.mxu0
  %v230 = vadd.f32 0.0, %v229
  %231 = vmatprep.mubr.f32.mxu0 0.0
  %232 = vmatmul.mubr.f32.gmra.mxu0 %v52
  %v233 = vpop.f32.mrf.mxu0
  %v234 = vadd.f32 0.0, %v233
  %v235 = vpop.f32.mrf.mxu0
  %v236 = vadd.f32 0.0, %v235
  %237 = vmatprep.mubr.f32.mxu0 0.0
  %238 = vmatmul.mubr.f32.gmra.mxu0 %v55
  %v239 = vpop.f32.mrf.mxu0
  %v240 = vadd.f32 0.0, %v239
  %v241 = vpop.f32.mrf.mxu0
  %v242 = vadd.f32 0.0, %v241
  %243 = vdwg.mxu0
  %v244 = vadd.f32 %v133, %v135
  %v245 = vadd.f32 %v244, %v222
  %v246 = vadd.f32 %v245, %v224
  %247 = vadd.xlane.f32.xlu0 %v246
  %v248 = vpop.xlane.xlu0 %247
  %v249 = vadd.f32 %v139, %v141
  %v250 = vadd.f32 %v249, %v228
  %v251 = vadd.f32 %v250, %v230
  %252 = vadd.xlane.f32.xlu0 %v251
  %v253 = vpop.xlane.xlu0 %252
  %v254 = vadd.f32 %v145, %v147
  %v255 = vadd.f32 %v254, %v234
  %v256 = vadd.f32 %v255, %v236
  %257 = vadd.xlane.f32.xlu0 %v256
  %v258 = vpop.xlane.xlu0 %257
  %v259 = vadd.f32 %v151, %v153
  %v260 = vadd.f32 %v259, %v240
  %v261 = vadd.f32 %v260, %v242
  %262 = vadd.xlane.f32.xlu0 %v261
  %v263 = vpop.xlane.xlu0 %262
  %v264 = vrcp.pop 512.0
  %v265 = vmul.f32 %v248, %v264
  %v266 = vmul.f32 %v253, %v264
  %v267 = vmul.f32 %v258, %v264
  %v268 = vmul.f32 %v263, %v264
  %v269 = vsub.f32 %v133, %v265
  %v270 = vsub.f32 %v135, %v265
  %v271 = vsub.f32 %v222, %v265
  %v272 = vsub.f32 %v224, %v265
  %v273 = vsub.f32 %v139, %v266
  %v274 = vsub.f32 %v141, %v266
  %v275 = vsub.f32 %v228, %v266
  %v276 = vsub.f32 %v230, %v266
  %v277 = vsub.f32 %v145, %v267
  %v278 = vsub.f32 %v147, %v267
  %v279 = vsub.f32 %v234, %v267
  %v280 = vsub.f32 %v236, %v267
  %v281 = vsub.f32 %v151, %v268
  %v282 = vsub.f32 %v153, %v268
  %v283 = vsub.f32 %v240, %v268
  %v284 = vsub.f32 %v242, %v268
  %v285 = vmul.f32 %v269, %v269
  %v286 = vmul.f32 %v270, %v270
  %v287 = vmul.f32 %v271, %v271
  %v288 = vmul.f32 %v272, %v272
  %v289 = vmul.f32 %v273, %v273
  %v290 = vmul.f32 %v274, %v274
  %v291 = vmul.f32 %v275, %v275
  %v292 = vmul.f32 %v276, %v276
  %v293 = vmul.f32 %v277, %v277
  %v294 = vmul.f32 %v278, %v278
  %v295 = vmul.f32 %v279, %v279
  %v296 = vmul.f32 %v280, %v280
  %v297 = vmul.f32 %v281, %v281
  %v298 = vmul.f32 %v282, %v282
  %v299 = vmul.f32 %v283, %v283
  %v300 = vmul.f32 %v284, %v284
  %v301 = vadd.f32 %v285, %v286
  %v302 = vadd.f32 %v301, %v287
  %v303 = vadd.f32 %v302, %v288
  %304 = vadd.xlane.f32.xlu0 %v303
  %v305 = vpop.xlane.xlu0 %304
  %v306 = vadd.f32 %v289, %v290
  %v307 = vadd.f32 %v306, %v291
  %v308 = vadd.f32 %v307, %v292
  %309 = vadd.xlane.f32.xlu0 %v308
  %v310 = vpop.xlane.xlu0 %309
  %v311 = vadd.f32 %v293, %v294
  %v312 = vadd.f32 %v311, %v295
  %v313 = vadd.f32 %v312, %v296
  %314 = vadd.xlane.f32.xlu0 %v313
  %v315 = vpop.xlane.xlu0 %314
  %v316 = vadd.f32 %v297, %v298
  %v317 = vadd.f32 %v316, %v299
  %v318 = vadd.f32 %v317, %v300
  %319 = vadd.xlane.f32.xlu0 %v318
  %v320 = vpop.xlane.xlu0 %319
  %v321 = vmul.f32 %v305, %v264
  %v322 = vmul.f32 %v310, %v264
  %v323 = vmul.f32 %v315, %v264
  %v324 = vmul.f32 %v320, %v264
  %v325 = vadd.f32 %v321, 1e-05
  %v326 = vadd.f32 %v322, 1e-05
  %v327 = vadd.f32 %v323, 1e-05
  %v328 = vadd.f32 %v324, 1e-05
  %v329 = vrsqrt.pop %v325
  %v330 = vrsqrt.pop %v326
  %v331 = vrsqrt.pop %v327
  %v332 = vrsqrt.pop %v328
  %v333 = vmul.f32 %v32, %v329
  %v334 = vmul.f32 %v33, %v330
  %v335 = vmul.f32 %v34, %v331
  %v336 = vmul.f32 %v35, %v332
  %338 = vset.pattern.permute.xlu0 0
  %339 = vperm.xlu0 %338, %v333
  %v340 = vpop.permute.xlu0 %339
  %343 = vset.pattern.permute.xlu0 0
  %344 = vperm.xlu0 %343, %v334
  %v345 = vpop.permute.xlu0 %344
  %348 = vset.pattern.permute.xlu0 0
  %349 = vperm.xlu0 %348, %v335
  %v350 = vpop.permute.xlu0 %349
  %353 = vset.pattern.permute.xlu0 0
  %354 = vperm.xlu0 %353, %v336
  %v355 = vpop.permute.xlu0 %354
  %v357 = vmul.f32 %v269, %v340
  %v358 = vmul.f32 %v270, %v340
  %v359 = vmul.f32 %v271, %v340
  %v360 = vmul.f32 %v272, %v340
  %v361 = vmul.f32 %v273, %v345
  %v362 = vmul.f32 %v274, %v345
  %v363 = vmul.f32 %v275, %v345
  %v364 = vmul.f32 %v276, %v345
  %v365 = vmul.f32 %v277, %v350
  %v366 = vmul.f32 %v278, %v350
  %v367 = vmul.f32 %v279, %v350
  %v368 = vmul.f32 %v280, %v350
  %v369 = vmul.f32 %v281, %v355
  %v370 = vmul.f32 %v282, %v355
  %v371 = vmul.f32 %v283, %v355
  %v372 = vmul.f32 %v284, %v355
  %374 = vset.pattern.permute.xlu0 0
  %375 = vperm.xlu0 %374, %v36
  %v376 = vpop.permute.xlu0 %375
  %379 = vset.pattern.permute.xlu0 0
  %380 = vperm.xlu0 %379, %v37
  %v381 = vpop.permute.xlu0 %380
  %384 = vset.pattern.permute.xlu0 0
  %385 = vperm.xlu0 %384, %v38
  %v386 = vpop.permute.xlu0 %385
  %389 = vset.pattern.permute.xlu0 0
  %390 = vperm.xlu0 %389, %v39
  %v391 = vpop.permute.xlu0 %390
  %v393 = vadd.f32 %v357, %v376
  %v394 = vadd.f32 %v358, %v376
  %v395 = vadd.f32 %v359, %v376
  %v396 = vadd.f32 %v360, %v376
  %v397 = vadd.f32 %v361, %v381
  %v398 = vadd.f32 %v362, %v381
  %v399 = vadd.f32 %v363, %v381
  %v400 = vadd.f32 %v364, %v381
  %v401 = vadd.f32 %v365, %v386
  %v402 = vadd.f32 %v366, %v386
  %v403 = vadd.f32 %v367, %v386
  %v404 = vadd.f32 %v368, %v386
  %v405 = vadd.f32 %v369, %v391
  %v406 = vadd.f32 %v370, %v391
  %v407 = vadd.f32 %v371, %v391
  %v408 = vadd.f32 %v372, %v391
  %v409 = vmax.f32 %v393, 0.0
  %v410 = vmax.f32 %v394, 0.0
  %v411 = vmax.f32 %v395, 0.0
  %v412 = vmax.f32 %v396, 0.0
  %v413 = vmax.f32 %v397, 0.0
  %v414 = vmax.f32 %v398, 0.0
  %v415 = vmax.f32 %v399, 0.0
  %v416 = vmax.f32 %v400, 0.0
  %v417 = vmax.f32 %v401, 0.0
  %v418 = vmax.f32 %v402, 0.0
  %v419 = vmax.f32 %v403, 0.0
  %v420 = vmax.f32 %v404, 0.0
  %v421 = vmax.f32 %v405, 0.0
  %v422 = vmax.f32 %v406, 0.0
  %v423 = vmax.f32 %v407, 0.0
  %v424 = vmax.f32 %v408, 0.0
  %v425 = vld [vmem:[%s4] sm:$0xff]
  %v426 = vld [vmem:[%s4 + $0x8] sm:$0xff]
  %v427 = vld [vmem:[%s5] sm:$0xff]
  %v428 = vld [vmem:[%s5 + $0x8] sm:$0xff]
  %v429 = vld [vmem:[%s6] sm:$0xff]
  %v430 = vld [vmem:[%s6 + $0x8] sm:$0xff]
  %vm431 = vcmask 261120
  %v433 = vsel %vm431, %v425, 0
  %v436 = vsel %vm431, %v426, 0
  %438 = vmatprep.subr.mxu0 0.0
  %439 = vmatpush1.msra.mxu0 0.0
  %440 = vmatprep.subr.mxu0 0.0
  %441 = vmatpush1.msra.mxu0 0.0
  %442 = vmatprep.subr.mxu0 0.0
  %443 = vmatpush1.msra.mxu0 0.0
  %444 = vmatprep.subr.mxu0 0.0
  %445 = vmatpush1.msra.mxu0 0.0
  %446 = vmatprep.subr.mxu0 0.0
  %447 = vmatpush1.msra.mxu0 0.0
  %448 = vmatprep.subr.mxu0 0.0
  %449 = vmatpush1.msra.mxu0 0.0
  %450 = vmatprep.subr.mxu0 0.0
  %451 = vmatpush1.msra.mxu0 0.0
  %452 = vmatprep.subr.mxu0 0.0
  %453 = vmatpush1.msra.mxu0 0.0
  %454 = vmatprep.subr.mxu0 0.0
  %455 = vmatpush1.msra.mxu0 0.0
  %456 = vmatprep.subr.mxu0 0.0
  %457 = vmatpush1.msra.mxu0 0.0
  %458 = vmatprep.subr.mxu0 0.0
  %459 = vmatpush1.msra.mxu0 0.0
  %460 = vmatprep.subr.mxu0 0.0
  %461 = vmatpush1.msra.mxu0 0.0
  %462 = vmatprep.subr.mxu0 %v422
  %463 = vmatpush1.msra.mxu0 %v421
  %464 = vmatprep.subr.mxu0 %v418
  %465 = vmatpush1.msra.mxu0 %v417
  %466 = vmatprep.subr.mxu0 %v414
  %467 = vmatpush1.msra.mxu0 %v413
  %468 = vmatprep.subr.mxu0 %v410
  %469 = vmatpush1.msra.mxu0 %v409
  %470 = vmatprep.subr.mxu0 0.0
  %471 = vmatpush2.msra.mxu0 0.0
  %472 = vmatprep.subr.mxu0 0.0
  %473 = vmatpush2.msra.mxu0 0.0
  %474 = vmatprep.subr.mxu0 0.0
  %475 = vmatpush2.msra.mxu0 0.0
  %476 = vmatprep.subr.mxu0 0.0
  %477 = vmatpush2.msra.mxu0 0.0
  %478 = vmatprep.subr.mxu0 0.0
  %479 = vmatpush2.msra.mxu0 0.0
  %480 = vmatprep.subr.mxu0 0.0
  %481 = vmatpush2.msra.mxu0 0.0
  %482 = vmatprep.subr.mxu0 0.0
  %483 = vmatpush2.msra.mxu0 0.0
  %484 = vmatprep.subr.mxu0 0.0
  %485 = vmatpush2.msra.mxu0 0.0
  %486 = vmatprep.subr.mxu0 0.0
  %487 = vmatpush2.msra.mxu0 0.0
  %488 = vmatprep.subr.mxu0 0.0
  %489 = vmatpush2.msra.mxu0 0.0
  %490 = vmatprep.subr.mxu0 0.0
  %491 = vmatpush2.msra.mxu0 0.0
  %492 = vmatprep.subr.mxu0 0.0
  %493 = vmatpush2.msra.mxu0 0.0
  %494 = vmatprep.subr.mxu0 0.0
  %495 = vmatpush2.msra.mxu0 0.0
  %496 = vmatprep.subr.mxu0 0.0
  %497 = vmatpush2.msra.mxu0 0.0
  %498 = vmatprep.subr.mxu0 0.0
  %499 = vmatpush2.msra.mxu0 0.0
  %500 = vmatprep.subr.mxu0 0.0
  %501 = vmatpush2.msra.mxu0 0.0
  %502 = vmatprep.mubr.f32.mxu0 0.0
  %503 = vmatmul.mubr.f32.gmra.mxu0 %v433
  %v504 = vpop.f32.mrf.mxu0
  %v505 = vadd.f32 0.0, %v504
  %v506 = vpop.f32.mrf.mxu0
  %v507 = vadd.f32 0.0, %v506
  %508 = vmatprep.mubr.f32.mxu0 0.0
  %509 = vmatmul.mubr.f32.gmra.mxu0 %v436
  %v510 = vpop.f32.mrf.mxu0
  %v511 = vadd.f32 0.0, %v510
  %v512 = vpop.f32.mrf.mxu0
  %v513 = vadd.f32 0.0, %v512
  %514 = vdwg.mxu0
  %515 = vmatprep.subr.mxu0 0.0
  %516 = vmatpush1.msra.mxu0 0.0
  %517 = vmatprep.subr.mxu0 0.0
  %518 = vmatpush1.msra.mxu0 0.0
  %519 = vmatprep.subr.mxu0 0.0
  %520 = vmatpush1.msra.mxu0 0.0
  %521 = vmatprep.subr.mxu0 0.0
  %522 = vmatpush1.msra.mxu0 0.0
  %523 = vmatprep.subr.mxu0 0.0
  %524 = vmatpush1.msra.mxu0 0.0
  %525 = vmatprep.subr.mxu0 0.0
  %526 = vmatpush1.msra.mxu0 0.0
  %527 = vmatprep.subr.mxu0 0.0
  %528 = vmatpush1.msra.mxu0 0.0
  %529 = vmatprep.subr.mxu0 0.0
  %530 = vmatpush1.msra.mxu0 0.0
  %531 = vmatprep.subr.mxu0 0.0
  %532 = vmatpush1.msra.mxu0 0.0
  %533 = vmatprep.subr.mxu0 0.0
  %534 = vmatpush1.msra.mxu0 0.0
  %535 = vmatprep.subr.mxu0 0.0
  %536 = vmatpush1.msra.mxu0 0.0
  %537 = vmatprep.subr.mxu0 0.0
  %538 = vmatpush1.msra.mxu0 0.0
  %539 = vmatprep.subr.mxu0 %v424
  %540 = vmatpush1.msra.mxu0 %v423
  %541 = vmatprep.subr.mxu0 %v420
  %542 = vmatpush1.msra.mxu0 %v419
  %543 = vmatprep.subr.mxu0 %v416
  %544 = vmatpush1.msra.mxu0 %v415
  %545 = vmatprep.subr.mxu0 %v412
  %546 = vmatpush1.msra.mxu0 %v411
  %547 = vmatprep.subr.mxu0 0.0
  %548 = vmatpush2.msra.mxu0 0.0
  %549 = vmatprep.subr.mxu0 0.0
  %550 = vmatpush2.msra.mxu0 0.0
  %551 = vmatprep.subr.mxu0 0.0
  %552 = vmatpush2.msra.mxu0 0.0
  %553 = vmatprep.subr.mxu0 0.0
  %554 = vmatpush2.msra.mxu0 0.0
  %555 = vmatprep.subr.mxu0 0.0
  %556 = vmatpush2.msra.mxu0 0.0
  %557 = vmatprep.subr.mxu0 0.0
  %558 = vmatpush2.msra.mxu0 0.0
  %559 = vmatprep.subr.mxu0 0.0
  %560 = vmatpush2.msra.mxu0 0.0
  %561 = vmatprep.subr.mxu0 0.0
  %562 = vmatpush2.msra.mxu0 0.0
  %563 = vmatprep.subr.mxu0 0.0
  %564 = vmatpush2.msra.mxu0 0.0
  %565 = vmatprep.subr.mxu0 0.0
  %566 = vmatpush2.msra.mxu0 0.0
  %567 = vmatprep.subr.mxu0 0.0
  %568 = vmatpush2.msra.mxu0 0.0
  %569 = vmatprep.subr.mxu0 0.0
  %570 = vmatpush2.msra.mxu0 0.0
  %571 = vmatprep.subr.mxu0 0.0
  %572 = vmatpush2.msra.mxu0 0.0
  %573 = vmatprep.subr.mxu0 0.0
  %574 = vmatpush2.msra.mxu0 0.0
  %575 = vmatprep.subr.mxu0 0.0
  %576 = vmatpush2.msra.mxu0 0.0
  %577 = vmatprep.subr.mxu0 0.0
  %578 = vmatpush2.msra.mxu0 0.0
  %579 = vmatprep.mubr.f32.mxu0 0.0
  %580 = vmatmul.mubr.f32.gmra.mxu0 %v433
  %v581 = vpop.f32.mrf.mxu0
  %v582 = vadd.f32 0.0, %v581
  %v583 = vpop.f32.mrf.mxu0
  %v584 = vadd.f32 0.0, %v583
  %585 = vmatprep.mubr.f32.mxu0 0.0
  %586 = vmatmul.mubr.f32.gmra.mxu0 %v436
  %v587 = vpop.f32.mrf.mxu0
  %v588 = vadd.f32 0.0, %v587
  %v589 = vpop.f32.mrf.mxu0
  %v590 = vadd.f32 0.0, %v589
  %591 = vdwg.mxu0
  %v592 = vadd.f32 %v505, %v507
  %v593 = vadd.f32 %v592, %v582
  %v594 = vadd.f32 %v593, %v584
  %595 = vadd.xlane.f32.xlu0 %v594
  %v596 = vpop.xlane.xlu0 %595
  %v597 = vadd.f32 %v511, %v513
  %v598 = vadd.f32 %v597, %v588
  %v599 = vadd.f32 %v598, %v590
  %600 = vadd.xlane.f32.xlu0 %v599
  %v601 = vpop.xlane.xlu0 %600
  %v602 = vmul.f32 %v596, %v264
  %v603 = vmul.f32 %v601, %v264
  %v604 = vsub.f32 %v505, %v602
  %v605 = vsub.f32 %v507, %v602
  %v606 = vsub.f32 %v582, %v602
  %v607 = vsub.f32 %v584, %v602
  %v608 = vsub.f32 %v511, %v603
  %v609 = vsub.f32 %v513, %v603
  %v610 = vsub.f32 %v588, %v603
  %v611 = vsub.f32 %v590, %v603
  %v612 = vmul.f32 %v604, %v604
  %v613 = vmul.f32 %v605, %v605
  %v614 = vmul.f32 %v606, %v606
  %v615 = vmul.f32 %v607, %v607
  %v616 = vmul.f32 %v608, %v608
  %v617 = vmul.f32 %v609, %v609
  %v618 = vmul.f32 %v610, %v610
  %v619 = vmul.f32 %v611, %v611
  %v620 = vadd.f32 %v612, %v613
  %v621 = vadd.f32 %v620, %v614
  %v622 = vadd.f32 %v621, %v615
  %623 = vadd.xlane.f32.xlu0 %v622
  %v624 = vpop.xlane.xlu0 %623
  %v625 = vadd.f32 %v616, %v617
  %v626 = vadd.f32 %v625, %v618
  %v627 = vadd.f32 %v626, %v619
  %628 = vadd.xlane.f32.xlu0 %v627
  %v629 = vpop.xlane.xlu0 %628
  %v630 = vmul.f32 %v624, %v264
  %v631 = vmul.f32 %v629, %v264
  %v632 = vadd.f32 %v630, 1e-05
  %v633 = vadd.f32 %v631, 1e-05
  %v634 = vrsqrt.pop %v632
  %v635 = vrsqrt.pop %v633
  %v636 = vmul.f32 %v427, %v634
  %v637 = vmul.f32 %v428, %v635
  %639 = vset.pattern.permute.xlu0 0
  %640 = vperm.xlu0 %639, %v636
  %v641 = vpop.permute.xlu0 %640
  %644 = vset.pattern.permute.xlu0 0
  %645 = vperm.xlu0 %644, %v637
  %v646 = vpop.permute.xlu0 %645
  %v648 = vmul.f32 %v604, %v641
  %v649 = vmul.f32 %v605, %v641
  %v650 = vmul.f32 %v606, %v641
  %v651 = vmul.f32 %v607, %v641
  %v652 = vmul.f32 %v608, %v646
  %v653 = vmul.f32 %v609, %v646
  %v654 = vmul.f32 %v610, %v646
  %v655 = vmul.f32 %v611, %v646
  %657 = vset.pattern.permute.xlu0 0
  %658 = vperm.xlu0 %657, %v429
  %v659 = vpop.permute.xlu0 %658
  %662 = vset.pattern.permute.xlu0 0
  %663 = vperm.xlu0 %662, %v430
  %v664 = vpop.permute.xlu0 %663
  %v666 = vadd.f32 %v648, %v659
  %v667 = vadd.f32 %v649, %v659
  %v668 = vadd.f32 %v650, %v659
  %v669 = vadd.f32 %v651, %v659
  %v670 = vadd.f32 %v652, %v664
  %v671 = vadd.f32 %v653, %v664
  %v672 = vadd.f32 %v654, %v664
  %v673 = vadd.f32 %v655, %v664
  %v674 = vmax.f32 %v666, 0.0
  %v675 = vmax.f32 %v667, 0.0
  %v676 = vmax.f32 %v668, 0.0
  %v677 = vmax.f32 %v669, 0.0
  %v678 = vmax.f32 %v670, 0.0
  %v679 = vmax.f32 %v671, 0.0
  %v680 = vmax.f32 %v672, 0.0
  %v681 = vmax.f32 %v673, 0.0
  %682 = vst [vmem:[%s7] sm:$0xff] %v674
  %683 = vst [vmem:[%s7 + $0x8] sm:$0xff] %v675
  %684 = vst [vmem:[%s7 + $0x10] sm:$0xff] %v676
  %685 = vst [vmem:[%s7 + $0x18] sm:$0xff] %v677
  %686 = vst [vmem:[%s7 + $0x20] sm:$0xff] %v678
  %687 = vst [vmem:[%s7 + $0x28] sm:$0xff] %v679
  %688 = vst [vmem:[%s7 + $0x30] sm:$0xff] %v680
  %689 = vst [vmem:[%s7 + $0x38] sm:$0xff] %v681
  // Predicated region
  $region30: #{mlp_forward.1} parent=0 // pred_check
    _
  $region31: #{mlp_forward.1} parent=0 // pred_check_branch
    %691 = sbr.rel (0) target = $region33
  $region32: #{mlp_forward.1} parent=0 // pred_region
    _
  $region33: #{mlp_forward.1} parent=0 // pred_fallthru
    _
  // Predicated region
  $region34: #{mlp_forward.1} parent=0 // pred_check
    _
  $region35: #{mlp_forward.1} parent=0 // pred_check_branch
    %693 = sbr.rel (0) target = $region37
  $region36: #{mlp_forward.1} parent=0 // pred_region
    _
  $region37: #{mlp_forward.1} parent=0 // pred_fallthru
    _

</llo_original>
